<compile_context>
chip_gen: v5e
topology: v5e:2x2
jax: 0.10.0
libtpu: 0.0.40
codegen_flags: <defaults>
</compile_context>

<pallas_src>
import functools

import jax
import jax.numpy as jnp
from jax import lax
from jax.experimental import pallas as pl
from jax.experimental.pallas import tpu as pltpu


_NEG_FILL = -1e30  # finite sentinel for out-of-span positions in the max path


# ----------------------------------------------------------------------------
# Pallas kernel
# ----------------------------------------------------------------------------
def _mention_extractor_kernel(starts_ref, ends_ref, x_ref, *rest,
                              pooling: str, d_model: int):
    need_mean = pooling in ("mean", "mean_max")
    need_max = pooling in ("max", "mean_max")

    if pooling == "mean_max":
        w_ref, b_ref, out_ref, sum_acc, max_acc = rest
    elif pooling == "mean":
        out_ref, sum_acc = rest
        w_ref = b_ref = max_acc = None
    else:  # "max"
        out_ref, max_acc = rest
        w_ref = b_ref = sum_acc = None

    s_idx = pl.program_id(2)
    n_seq_tiles = pl.num_programs(2)

    ts = x_ref.shape[1]        # seq-tile size (static)
    tn = starts_ref.shape[1]   # span-tile size (static)
    base = s_idx * ts          # global seq offset of this tile

    # --- init accumulators at the first seq tile ---------------------------
    @pl.when(s_idx == 0)
    def _init():
        if need_mean:
            sum_acc[...] = jnp.zeros_like(sum_acc)
        if need_max:
            max_acc[...] = jnp.full_like(max_acc, _NEG_FILL)

    starts = starts_ref[0]     # (TN, 1) int32
    ends = ends_ref[0]         # (TN, 1) int32

    # --- mean: width-scaled mask matmul on the MXU -------------------------
    if need_mean:
        x = x_ref[0]                                                     # (TS, D)
        pos = lax.broadcasted_iota(jnp.int32, (tn, ts), 1) + base        # (TN, TS)
        in_span = jnp.logical_and(pos >= starts, pos <= ends)            # (TN, TS)
        # clamp degenerate (end < start) spans to width >= 1 to avoid inf/nan
        widths = jnp.maximum(ends - starts + 1, 1).astype(jnp.float32)   # (TN, 1)
        inv_w = pl.reciprocal(widths, approx=True)                       # EUP, not VALU
        mask_scaled = in_span.astype(jnp.float32) * inv_w                # (TN, TS)
        sum_acc[...] += jnp.dot(mask_scaled.astype(x.dtype), x,
                                preferred_element_type=jnp.float32)

    # --- max: running max, one seq row at a time (O(TN*D) working set) -----
    if need_max:
        def seq_body(j, acc):
            gp = base + j
            x_row = x_ref[0, pl.ds(j, 1), :].astype(jnp.float32)         # (1, D)
            cond = jnp.logical_and(starts <= gp, ends >= gp)             # (TN, 1)
            return jnp.where(cond, jnp.maximum(acc, x_row), acc)

        max_acc[...] = lax.fori_loop(0, ts, seq_body, max_acc[...])

    # --- finalize at the last seq tile --------------------------------------
    @pl.when(s_idx == n_seq_tiles - 1)
    def _finalize():
        if pooling == "mean":
            out_ref[0] = sum_acc[...].astype(out_ref.dtype)
        elif pooling == "max":
            out_ref[0] = max_acc[...].astype(out_ref.dtype)
        else:  # mean_max: two accumulating matmuls, no concat, no transpose
            dn = (((1,), (1,)), ((), ()))  # contract feature dim with w's in-dim
            w_dtype = w_ref.dtype
            mx = max_acc[...].astype(w_dtype)
            mn = sum_acc[...].astype(w_dtype)
            out = lax.dot_general(mx, w_ref[:, 0:d_model], dn,
                                  preferred_element_type=jnp.float32)
            out = out + lax.dot_general(mn, w_ref[:, d_model:2 * d_model], dn,
                                        preferred_element_type=jnp.float32)
            out_ref[0] = (out + b_ref[...].astype(jnp.float32)).astype(out_ref.dtype)


# ----------------------------------------------------------------------------
# Wrapper
# ----------------------------------------------------------------------------
def _pick_tile(total, candidates):
    for c in candidates:
        if c <= total and total % c == 0:
            return c
    return total


def mention_extractor(sentence_repr, entity_span_indices,
                      proj_weight=None, proj_bias=None, *, pooling: str = "mean_max"):
    """
    sentence_repr:        (B, S, D)
    entity_span_indices:  (B, N, 2) int (start, end-inclusive)
    proj_weight:          (D, 2D)  torch nn.Linear weight layout (only for mean_max)
    proj_bias:            (D,)                              (only for mean_max)
    returns:              (B, N, D)
    """
    assert pooling in ("mean", "max", "mean_max")
    B, S, D = sentence_repr.shape
    N = entity_span_indices.shape[1]

    starts = entity_span_indices[..., 0:1].astype(jnp.int32)   # (B, N, 1)
    ends = entity_span_indices[..., 1:2].astype(jnp.int32)     # (B, N, 1)

    # Tile sizes: seq tiles bound the VMEM footprint (TS*D per buffer); span tiles
    # bound the accumulators (TN*D) and give the mask matmul a decent M dimension.
    TS = _pick_tile(S, (512, 256, 128))
    TN = _pick_tile(N, (128,))
    grid = (B, pl.cdiv(N, TN), pl.cdiv(S, TS))

    in_specs = [
        pl.BlockSpec((1, TN, 1), lambda b, n, s: (b, n, 0)),   # starts
        pl.BlockSpec((1, TN, 1), lambda b, n, s: (b, n, 0)),   # ends
        pl.BlockSpec((1, TS, D), lambda b, n, s: (b, s, 0)),   # sentence_repr
    ]
    args = [starts, ends, sentence_repr]

    scratch = []
    if pooling in ("mean", "mean_max"):
        scratch.append(pltpu.VMEM((TN, D), jnp.float32))       # sum accumulator
    if pooling in ("max", "mean_max"):
        scratch.append(pltpu.VMEM((TN, D), jnp.float32))       # max accumulator

    if pooling == "mean_max":
        assert proj_weight is not None and proj_bias is not None
        # Weight kept in torch (D, 2D) layout: no transpose op outside the kernel.
        # (On v7x one could additionally single-buffer these constant-index operands.)
        in_specs += [
            pl.BlockSpec((D, 2 * D), lambda b, n, s: (0, 0)),
            pl.BlockSpec((1, D), lambda b, n, s: (0, 0)),
        ]
        args += [proj_weight, proj_bias.reshape(1, D)]

    kernel = functools.partial(_mention_extractor_kernel, pooling=pooling, d_model=D)

    return pl.pallas_call(
        kernel,
        out_shape=jax.ShapeDtypeStruct((B, N, D), sentence_repr.dtype),
        grid_spec=pltpu.PrefetchScalarGridSpec(
            num_scalar_prefetch=0,
            grid=grid,
            in_specs=in_specs,
            out_specs=pl.BlockSpec((1, TN, D), lambda b, n, s: (b, n, 0)),
            scratch_shapes=scratch,
        ),
        compiler_params=pltpu.CompilerParams(
            dimension_semantics=("parallel", "parallel", "arbitrary")),
    )(*args)


# ----------------------------------------------------------------------------
# Pure-JAX reference that mirrors the PyTorch forward (gather-based) exactly
# ----------------------------------------------------------------------------
def reference(sentence_repr, entity_span_indices, proj_weight, proj_bias, pooling):
    starts = entity_span_indices[..., 0:1].astype(jnp.int32)     # (B, N, 1)
    ends = entity_span_indices[..., 1:2].astype(jnp.int32)       # (B, N, 1)
    span_widths = ends - starts                                  # (B, N, 1)
    max_w = int(jnp.max(span_widths)) + 1
    rng = jnp.arange(max_w).reshape(1, 1, -1)                    # (1, 1, W)
    mask = (rng <= span_widths).astype(jnp.float32)
    raw = ends - rng                                             # (B, N, W)
    mask = mask * (raw >= 0).astype(jnp.float32)
    span_idx = jnp.maximum(raw, 0)
    gathered = jax.vmap(lambda xb, ib: jnp.take(xb, ib, axis=0))(
        sentence_repr, span_idx)                                 # (B, N, W, D)
    widths_f = (span_widths + 1).astype(jnp.float32)
    if pooling == "max":
        return jnp.max(gathered - (1.0 - mask[..., None]) * 1e32, axis=2)
    if pooling == "mean":
        return jnp.sum(gathered * mask[..., None], axis=2) / widths_f
    mx = jnp.max(gathered - (1.0 - mask[..., None]) * 1e32, axis=2)
    mn = jnp.sum(gathered * mask[..., None], axis=2) / widths_f
    cat = jnp.concatenate([mx, mn], axis=-1)
    return cat @ proj_weight.T + proj_bias


# ----------------------------------------------------------------------------
# Demo
# ----------------------------------------------------------------------------
if __name__ == "__main__":
    B, S, N, D = 2, 16, 8, 128   # batch, seq_len, num_spans, in_features

    key = jax.random.PRNGKey(0)
    k1, k2, k3, k4, k5 = jax.random.split(key, 5)

    sentence_repr = jax.random.normal(k1, (B, S, D), dtype=jnp.float32)
    span_starts = jax.random.randint(k2, (B, N), 0, S)
    span_lens = jax.random.randint(k3, (B, N), 0, S)
    span_ends = jnp.minimum(span_starts + span_lens, S - 1)
    entity_span_indices = jnp.stack([span_starts, span_ends], axis=-1).astype(jnp.int32)

    # Deterministic init of the mean-max down-projection (nn.Linear(2D, D))
    proj_weight = (0.02 * jax.random.normal(k4, (D, 2 * D))).astype(jnp.float32)
    proj_bias = (0.02 * jax.random.normal(k5, (D,))).astype(jnp.float32)

    for pooling in ("max", "mean", "mean_max"):
        out = mention_extractor(sentence_repr, entity_span_indices,
                                proj_weight, proj_bias, pooling=pooling)
        jax.block_until_ready(out)
        ref = reference(sentence_repr, entity_span_indices,
                        proj_weight, proj_bias, pooling)
        assert out.shape == (B, N, D)
        # tolerance slightly loosened: mean path uses the EUP approx reciprocal
        assert jnp.allclose(out, ref, atol=2e-3, rtol=2e-3), f"mismatch for {pooling}"

    print("KERNEL_OK")
</pallas_src>

<mosaic_0001>
module attributes {stable_mosaic.version = 11 : i64} {
  func.func @_mention_extractor_kernel(%arg0: i32, %arg1: i32, %arg2: i32, %arg3: memref<1x8x1xi32, #tpu.memory_space<vmem>>, %arg4: memref<1x8x1xi32, #tpu.memory_space<vmem>>, %arg5: memref<1x16x128xf32, #tpu.memory_space<vmem>>, %arg6: memref<1x8x128xf32, #tpu.memory_space<vmem>>, %arg7: memref<8x128xf32, #tpu.memory_space<vmem>>) attributes {dimension_semantics = [#tpu.dimension_semantics<parallel>, #tpu.dimension_semantics<parallel>, #tpu.dimension_semantics<arbitrary>], iteration_bounds = array<i64: 2, 1, 1>, scalar_prefetch = 0 : i64, scratch_operands = 1 : i64, tpu.core_type = #tpu.core_type<tc>, window_params = [{transform_indices = @transform_0, window_bounds = array<i64: 1, 8, 1>}, {transform_indices = @transform_1, window_bounds = array<i64: 1, 8, 1>}, {transform_indices = @transform_2, window_bounds = array<i64: 1, 16, 128>}, {transform_indices = @transform_3, window_bounds = array<i64: 1, 8, 128>}]} {
    %c16_i32 = arith.constant 16 : i32
    %0 = arith.muli %arg2, %c16_i32 : i32
    %c0_i32 = arith.constant 0 : i32
    %1 = arith.cmpi eq, %arg2, %c0_i32 : i32
    %2 = arith.extui %1 : i1 to i32
    %c0_i32_0 = arith.constant 0 : i32
    %3 = arith.cmpi ne, %2, %c0_i32_0 : i32
    scf.if %3 {
      %cst = arith.constant -1.000000e+30 : f32
      %15 = vector.broadcast %cst : f32 to vector<8x128xf32>
      %c0_15 = arith.constant 0 : index
      %c0_16 = arith.constant 0 : index
      %16 = vector.load %arg7[%c0_15, %c0_16] : memref<8x128xf32, #tpu.memory_space<vmem>>, vector<8x128xf32>
      tpu.vector_store %arg7[%c0_15, %c0_16], %15 {strides = array<i32>} : memref<8x128xf32, #tpu.memory_space<vmem>>, vector<8x128xf32>,
    } else {
    }
    %c0 = arith.constant 0 : index
    %c0_1 = arith.constant 0 : index
    %c0_2 = arith.constant 0 : index
    %4 = vector.load %arg3[%c0, %c0_1, %c0_2] : memref<1x8x1xi32, #tpu.memory_space<vmem>>, vector<1x8x1xi32>
    %5 = vector.shape_cast %4 : vector<1x8x1xi32> to vector<8x1xi32>
    %c0_3 = arith.constant 0 : index
    %c0_4 = arith.constant 0 : index
    %c0_5 = arith.constant 0 : index
    %6 = vector.load %arg4[%c0_3, %c0_4, %c0_5] : memref<1x8x1xi32, #tpu.memory_space<vmem>>, vector<1x8x1xi32>
    %7 = vector.shape_cast %6 : vector<1x8x1xi32> to vector<8x1xi32>
    %c0_6 = arith.constant 0 : index
    %c0_7 = arith.constant 0 : index
    %8 = vector.load %arg7[%c0_6, %c0_7] : memref<8x128xf32, #tpu.memory_space<vmem>>, vector<8x128xf32>
    %c0_i32_8 = arith.constant 0 : i32
    %c16_i32_9 = arith.constant 16 : i32
    %9 = arith.addi %c0_i32_8, %c16_i32_9 : i32
    %c1_i32 = arith.constant 1 : i32
    %10 = scf.for %arg8 = %c0_i32_8 to %9 step %c1_i32 iter_args(%arg9 = %8) -> (vector<8x128xf32>)  : i32 {
      %15 = arith.addi %0, %arg8 : i32
      %c0_15 = arith.constant 0 : index
      %16 = arith.index_cast %arg8 : i32 to index
      %c0_16 = arith.constant 0 : index
      %17 = vector.load %arg5[%c0_15, %16, %c0_16] : memref<1x16x128xf32, #tpu.memory_space<vmem>>, vector<1x1x128xf32>
      %18 = vector.shape_cast %17 : vector<1x1x128xf32> to vector<1x128xf32>
      %19 = vector.broadcast %15 : i32 to vector<8x1xi32>
      %20 = arith.cmpi sle, %5, %19 : vector<8x1xi32>
      %21 = vector.broadcast %15 : i32 to vector<8x1xi32>
      %22 = arith.cmpi sge, %7, %21 : vector<8x1xi32>
      %23 = arith.andi %20, %22 : vector<8x1xi1>
      %24 = vector.broadcast %18 : vector<1x128xf32> to vector<8x128xf32>
      %25 = arith.maximumf %arg9, %24 : vector<8x128xf32>
      %26 = vector.shape_cast %23 : vector<8x1xi1> to vector<8x1xi1>
      %27 = vector.broadcast %26 : vector<8x1xi1> to vector<8x128xi1>
      %28 = arith.select %27, %25, %arg9 : vector<8x128xi1>, vector<8x128xf32>
      scf.yield %28 : vector<8x128xf32>
    }
    %c16_i32_10 = arith.constant 16 : i32
    %c0_11 = arith.constant 0 : index
    %c0_12 = arith.constant 0 : index
    %11 = vector.load %arg7[%c0_11, %c0_12] : memref<8x128xf32, #tpu.memory_space<vmem>>, vector<8x128xf32>
    tpu.vector_store %arg7[%c0_11, %c0_12], %10 {strides = array<i32>} : memref<8x128xf32, #tpu.memory_space<vmem>>, vector<8x128xf32>,
    %c0_i32_13 = arith.constant 0 : i32
    %12 = arith.cmpi eq, %arg2, %c0_i32_13 : i32
    %13 = arith.extui %12 : i1 to i32
    %c0_i32_14 = arith.constant 0 : i32
    %14 = arith.cmpi ne, %13, %c0_i32_14 : i32
    scf.if %14 {
      %c0_15 = arith.constant 0 : index
      %c0_16 = arith.constant 0 : index
      %15 = vector.load %arg7[%c0_15, %c0_16] : memref<8x128xf32, #tpu.memory_space<vmem>>, vector<8x128xf32>
      %c0_17 = arith.constant 0 : index
      %c0_18 = arith.constant 0 : index
      %c0_19 = arith.constant 0 : index
      %16 = vector.load %arg6[%c0_17, %c0_18, %c0_19] : memref<1x8x128xf32, #tpu.memory_space<vmem>>, vector<1x8x128xf32>
      %17 = vector.shape_cast %16 : vector<1x8x128xf32> to vector<8x128xf32>
      %18 = vector.shape_cast %15 : vector<8x128xf32> to vector<1x8x128xf32>
      tpu.vector_store %arg6[%c0_17, %c0_18, %c0_19], %18 {strides = array<i32>} : memref<1x8x128xf32, #tpu.memory_space<vmem>>, vector<1x8x128xf32>,
    } else {
    }
    return
  }
  func.func @transform_0(%arg0: i32, %arg1: i32, %arg2: i32) -> (i32, i32, i32) {
    %c0_i32 = arith.constant 0 : i32
    %c0_i32_0 = arith.constant 0 : i32
    return %arg0, %arg1, %c0_i32 : i32, i32, i32
  }
  func.func @transform_1(%arg0: i32, %arg1: i32, %arg2: i32) -> (i32, i32, i32) {
    %c0_i32 = arith.constant 0 : i32
    %c0_i32_0 = arith.constant 0 : i32
    return %arg0, %arg1, %c0_i32 : i32, i32, i32
  }
  func.func @transform_2(%arg0: i32, %arg1: i32, %arg2: i32) -> (i32, i32, i32) {
    %c0_i32 = arith.constant 0 : i32
    %c0_i32_0 = arith.constant 0 : i32
    return %arg0, %arg2, %c0_i32 : i32, i32, i32
  }
  func.func @transform_3(%arg0: i32, %arg1: i32, %arg2: i32) -> (i32, i32, i32) {
    %c0_i32 = arith.constant 0 : i32
    %c0_i32_0 = arith.constant 0 : i32
    return %arg0, %arg1, %c0_i32 : i32, i32, i32
  }
}

</mosaic_0001>

<llo_original>
// kernel: tpu_custom_call.1
$region0: #{tpu_custom_call.1}
  #allocation0 [shape = 'u32[]', space=smem, size = 0x4, offset = 0x4, fixed_abs, tag = 'smem constant byte address 0x4 - core index']
  #allocation1 [shape = 'u32[72,128]{1,0:T(1,128)}', space=vmem, size = 0x9000, scoped, tag = 'internal scratch']
  #allocation2 [shape = 'f32[8,128]{1,0:T(8,128)}', space=vmem, size = 0x1000, scoped, tag = 'scratch operand']
  %s0 = inlined_call_operand.vmem [shape: s32[2,8,1], index: 0, kind: input, shape index: {}]
  %s1 = inlined_call_operand.vmem [shape: s32[2,8,1], index: 1, kind: input, shape index: {}]
  %s2 = inlined_call_operand.vmem [shape: f32[2,16,128], index: 2, kind: input, shape index: {}]
  %s3 = inlined_call_operand.hbm [shape: f32[2,8,128], index: 3, kind: output, shape index: {}]
  %s4 = sld [smem:[#allocation0]]
  $region60: #{tpu_custom_call.1} parent=0
    _
  %s6 = ssub.s32 1, %s4
  %s7 = scalar_select 0, %s6, %s4
  $region1: #{tpu_custom_call.1} parent=0
    #allocation3 [shape = 'u8[8192]{0}', space=vmem, size = 0x2000, scoped, tag = 'output window, operand 0']
    #allocation4 [shape = 's32[2]{0}', space=sflag, size = 0x8, scoped, tag = 'scoped memory for tpu_custom_call.1']
    %8 = vsyncpa [#allocation4], 0
    %s9 = scalar_lea.sflag [#allocation4], 1
    %10 = vsyncpa %s9, 0
    loop: start=0, step=1, limit=4
    $region2: #{tpu_custom_call.1} parent=1 // loop_pre_header
      _
    $region3: #{tpu_custom_call.1} parent=1 // loop_header
      %s12 = sphi 0, %s16
      %p13 = scmp.ge.s32.totalorder %s12, 4
      %s19 = sphi 0, %s38
      %s20 = sphi 0, %s34
      %s21 = sphi 0, %s30
      %s22 = sphi 0, %s19
      %s23 = sphi 0, %s20
      %s24 = sphi 0, %s21
      %s25 = sphi 0, %s22
      %s26 = sphi 0, %s23
      %s27 = sphi 0, %s24
      %s43 = sphi 0, %s45
      %s46 = sphi 0, %s43
      %s47 = sphi 0, %s46
      %s63 = sphi 0, %s47
      %s71 = sphi 0, %s73
      %s74 = sphi 0, %s71
      %s75 = sphi 0, %s74
      %s91 = sphi 0, %s75
      %s99 = sphi 0, %s101
      %s102 = sphi 0, %s99
      %s103 = sphi 0, %s102
      %s119 = sphi 0, %s103
      %s127 = sphi 0, %s129
      %s130 = sphi 0, %s127
      %s131 = sphi 0, %s130
      %s147 = sphi 0, %s131
    $region4: #{tpu_custom_call.1} parent=1 // loop_header_branch
      %15 = sbr.rel (%p13) target = $region8
    $region5: #{tpu_custom_call.1} parent=1 // loop_body
      %s17 = ssub.s32 %s12, 1
      %s18 = ssub.s32 %s12, 2
      %s28 = sadd.s32 1, %s21
      %p29 = scmp.ge.s32.totalorder %s28, 1
      %s30 = scalar_select %p29, 0, %s28
      %s31 = sadd.s32 1, %s20
      %s32 = scalar_select %p29, %s31, %s20
      %p33 = scmp.ge.s32.totalorder %s32, 1
      %s34 = scalar_select %p33, 0, %s32
      %s35 = sadd.s32 1, %s19
      %s36 = scalar_select %p33, %s35, %s19
      %p37 = scmp.ge.s32.totalorder %s36, 2
      %s38 = scalar_select %p37, 0, %s36
      %s39 = ssub.s32 %s19, %s38
      %s40 = ssub.s32 %s20, %s34
      %s41 = sor.u32 %s39, %s40
      %p42 = scmp.eq.s32.totalorder %s41, 0
      %s44 = sadd.s32 %s43, 1
      %s45 = scalar_select %p42, %s43, %s44
      %p48 = pneg %p42
      %p49 = scmp.eq.s32.totalorder %s12, 1
      %p50 = por %p48, %p49
      %p51 = scmp.ne.s32.totalorder %s43, %s46
      %p52 = scmp.eq.s32.totalorder %s12, 0
      %p53 = por %p51, %p52
      %p54 = scmp.ne.s32.totalorder %s43, %s46
      %p55 = scmp.eq.s32.totalorder %s17, 1
      %p56 = por %p54, %p55
      %p57 = scmp.ne.s32.totalorder %s46, %s47
      %p58 = scmp.eq.s32.totalorder %s17, 0
      %p59 = por %p57, %p58
      %p60 = scmp.ne.s32.totalorder %s46, %s47
      %p61 = scmp.eq.s32.totalorder %s18, 1
      %p62 = por %p60, %p61
      %p64 = scmp.ne.s32.totalorder %s47, %s63
      %p65 = scmp.eq.s32.totalorder %s18, 0
      %p66 = por %p64, %p65
      %s67 = ssub.s32 %s19, %s38
      %s68 = ssub.s32 %s20, %s34
      %s69 = sor.u32 %s67, %s68
      %p70 = scmp.eq.s32.totalorder %s69, 0
      %s72 = sadd.s32 %s71, 1
      %s73 = scalar_select %p70, %s71, %s72
      %p76 = pneg %p70
      %p77 = scmp.eq.s32.totalorder %s12, 1
      %p78 = por %p76, %p77
      %p79 = scmp.ne.s32.totalorder %s71, %s74
      %p80 = scmp.eq.s32.totalorder %s12, 0
      %p81 = por %p79, %p80
      %p82 = scmp.ne.s32.totalorder %s71, %s74
      %p83 = scmp.eq.s32.totalorder %s17, 1
      %p84 = por %p82, %p83
      %p85 = scmp.ne.s32.totalorder %s74, %s75
      %p86 = scmp.eq.s32.totalorder %s17, 0
      %p87 = por %p85, %p86
      %p88 = scmp.ne.s32.totalorder %s74, %s75
      %p89 = scmp.eq.s32.totalorder %s18, 1
      %p90 = por %p88, %p89
      %p92 = scmp.ne.s32.totalorder %s75, %s91
      %p93 = scmp.eq.s32.totalorder %s18, 0
      %p94 = por %p92, %p93
      %s95 = ssub.s32 %s19, %s38
      %s96 = ssub.s32 %s21, %s30
      %s97 = sor.u32 %s95, %s96
      %p98 = scmp.eq.s32.totalorder %s97, 0
      %s100 = sadd.s32 %s99, 1
      %s101 = scalar_select %p98, %s99, %s100
      %p104 = pneg %p98
      %p105 = scmp.eq.s32.totalorder %s12, 1
      %p106 = por %p104, %p105
      %p107 = scmp.ne.s32.totalorder %s99, %s102
      %p108 = scmp.eq.s32.totalorder %s12, 0
      %p109 = por %p107, %p108
      %p110 = scmp.ne.s32.totalorder %s99, %s102
      %p111 = scmp.eq.s32.totalorder %s17, 1
      %p112 = por %p110, %p111
      %p113 = scmp.ne.s32.totalorder %s102, %s103
      %p114 = scmp.eq.s32.totalorder %s17, 0
      %p115 = por %p113, %p114
      %p116 = scmp.ne.s32.totalorder %s102, %s103
      %p117 = scmp.eq.s32.totalorder %s18, 1
      %p118 = por %p116, %p117
      %p120 = scmp.ne.s32.totalorder %s103, %s119
      %p121 = scmp.eq.s32.totalorder %s18, 0
      %p122 = por %p120, %p121
      %s123 = ssub.s32 %s19, %s38
      %s124 = ssub.s32 %s20, %s34
      %s125 = sor.u32 %s123, %s124
      %p126 = scmp.eq.s32.totalorder %s125, 0
      %s128 = sadd.s32 %s127, 1
      %s129 = scalar_select %p126, %s127, %s128
      %p132 = pneg %p126
      %p133 = scmp.eq.s32.totalorder %s12, 1
      %p134 = por %p132, %p133
      %p135 = scmp.ne.s32.totalorder %s127, %s130
      %p136 = scmp.eq.s32.totalorder %s12, 0
      %p137 = por %p135, %p136
      %p138 = scmp.ne.s32.totalorder %s127, %s130
      %p139 = scmp.eq.s32.totalorder %s17, 1
      %p140 = por %p138, %p139
      %p141 = scmp.ne.s32.totalorder %s130, %s131
      %p142 = scmp.eq.s32.totalorder %s17, 0
      %p143 = por %p141, %p142
      %p144 = scmp.ne.s32.totalorder %s130, %s131
      %p145 = scmp.eq.s32.totalorder %s18, 1
      %p146 = por %p144, %p145
      %p148 = scmp.ne.s32.totalorder %s131, %s147
      %p149 = scmp.eq.s32.totalorder %s18, 0
      %p150 = por %p148, %p149
      %p151 = scmp.le.s32.totalorder 1, %s12
      %p152 = scmp.lt.s32.totalorder %s12, 3
      %p153 = pnand %p151, %p152
      %p154 = pneg %p153
      // Predicated region
      $region9: #{tpu_custom_call.1} parent=5 // pred_check
        _
      $region10: #{tpu_custom_call.1} parent=5 // pred_check_branch
        %156 = sbr.rel (%p153) target = $region12
      $region11: #{tpu_custom_call.1} parent=5 // pred_region
        %s157 = ssub.s32 %s12, 1
      $region12: #{tpu_custom_call.1} parent=5 // pred_fallthru
        _
      %p158 = scmp.lt.s32.totalorder %s12, 2
      // Predicated region
      $region13: #{tpu_custom_call.1} parent=5 // pred_check
        %p159 = pneg %p158
      $region14: #{tpu_custom_call.1} parent=5 // pred_check_branch
        %161 = sbr.rel (%p159) target = $region16
      $region15: #{tpu_custom_call.1} parent=5 // pred_region
        // Predicated region
        $region17: #{tpu_custom_call.1} parent=15 // pred_check
          %p162 = pneg %p53
        $region18: #{tpu_custom_call.1} parent=15 // pred_check_branch
          %164 = sbr.rel (%p162) target = $region20
        $region19: #{tpu_custom_call.1} parent=15 // pred_region
          %p165 = scmp.lt.s32.totalorder %s19, 1
          %s166 = scalar_select %p165, %s19, 1
          %p167 = scmp.lt.s32.totalorder %s20, 0
          %s168 = scalar_select %p167, %s20, 0
          %s169 = sadd.s32 %s168, %s166
          %s170 = smul.addr %s169, 8
          %s171 = scalar_lea.vmem %s0, %s170
        $region20: #{tpu_custom_call.1} parent=15 // pred_fallthru
          _
        // Predicated region
        $region21: #{tpu_custom_call.1} parent=15 // pred_check
          %p172 = pneg %p81
        $region22: #{tpu_custom_call.1} parent=15 // pred_check_branch
          %174 = sbr.rel (%p172) target = $region24
        $region23: #{tpu_custom_call.1} parent=15 // pred_region
          %p175 = scmp.lt.s32.totalorder %s19, 1
          %s176 = scalar_select %p175, %s19, 1
          %p177 = scmp.lt.s32.totalorder %s20, 0
          %s178 = scalar_select %p177, %s20, 0
          %s179 = sadd.s32 %s178, %s176
          %s180 = smul.addr %s179, 8
          %s181 = scalar_lea.vmem %s1, %s180
        $region24: #{tpu_custom_call.1} parent=15 // pred_fallthru
          _
        // Predicated region
        $region25: #{tpu_custom_call.1} parent=15 // pred_check
          %p182 = pneg %p109
        $region26: #{tpu_custom_call.1} parent=15 // pred_check_branch
          %184 = sbr.rel (%p182) target = $region28
        $region27: #{tpu_custom_call.1} parent=15 // pred_region
          %s185 = smul.u32 2, %s21
          %p186 = scmp.lt.s32.totalorder %s19, 1
          %s187 = scalar_select %p186, %s19, 1
          %p188 = scmp.lt.s32.totalorder %s185, 1
          %s189 = scalar_select %p188, %s185, 1
          %s190 = smul.addr %s187, 2
          %s191 = sadd.s32 %s189, %s190
          %s192 = smul.addr %s191, 8
          %s193 = scalar_lea.vmem %s2, %s192
          %s194 = smul.u32 2, %s21
        $region28: #{tpu_custom_call.1} parent=15 // pred_fallthru
          _
      $region16: #{tpu_custom_call.1} parent=5 // pred_fallthru
        _
      %p195 = scmp.le.s32.totalorder 1, %s12
      %p196 = scmp.lt.s32.totalorder %s12, 3
      %p197 = pnand %p195, %p196
      %p198 = pneg %p197
      // Predicated region
      $region29: #{tpu_custom_call.1} parent=5 // pred_check
        _
      $region30: #{tpu_custom_call.1} parent=5 // pred_check_branch
        %200 = sbr.rel (%p197) target = $region32
      $region31: #{tpu_custom_call.1} parent=5 // pred_region
        %s201 = ssub.s32 %s12, 1
        %p202 = scmp.lt.s32.totalorder %s22, 1
        %s203 = scalar_select %p202, %s22, 1
        %p204 = scmp.lt.s32.totalorder %s23, 0
        %s205 = scalar_select %p204, %s23, 0
        %s206 = sadd.s32 %s205, %s203
        %s207 = smul.addr %s206, 8
        %s208 = scalar_lea.vmem %s0, %s207
        %p209 = pneg %p59
        %p210 = pneg %p56
        %p211 = scmp.lt.s32.totalorder %s22, 1
        %s212 = scalar_select %p211, %s22, 1
        %p213 = scmp.lt.s32.totalorder %s23, 0
        %s214 = scalar_select %p213, %s23, 0
        %s215 = sadd.s32 %s214, %s212
        %s216 = smul.addr %s215, 8
        %s217 = scalar_lea.vmem %s1, %s216
        %p218 = pneg %p87
        %p219 = pneg %p84
        %s220 = smul.u32 2, %s24
        %p221 = scmp.lt.s32.totalorder %s22, 1
        %s222 = scalar_select %p221, %s22, 1
        %p223 = scmp.lt.s32.totalorder %s220, 1
        %s224 = scalar_select %p223, %s220, 1
        %s225 = smul.addr %s222, 2
        %s226 = sadd.s32 %s224, %s225
        %s227 = smul.addr %s226, 8
        %s228 = scalar_lea.vmem %s2, %s227
        %p229 = pneg %p115
        %p230 = pneg %p112
        %p231 = pneg %p143
        %p232 = pneg %p140
        %s233 = sand.u32 %s130, 1
        %s234 = scalar_lea.sflag [#allocation4], %s233
        %s235 = sand.u32 %s130, 1
        %s236 = smul.addr %s235, 8
        %s237 = scalar_lea.vmem [#allocation3], %s236
        %p238 = scmp.lt.s32.totalorder %s22, 1
        %s239 = scalar_select %p238, %s22, 1
        %p240 = scmp.lt.s32.totalorder %s23, 0
        %s241 = scalar_select %p240, %s23, 0
        %s242 = sadd.s32 %s241, %s239
        %s243 = smul.addr %s242, 8
        %s244 = scalar_lea.vmem %s0, %s243
        %p245 = scmp.lt.s32.totalorder %s22, 1
        %s246 = scalar_select %p245, %s22, 1
        %p247 = scmp.lt.s32.totalorder %s23, 0
        %s248 = scalar_select %p247, %s23, 0
        %s249 = sadd.s32 %s248, %s246
        %s250 = smul.addr %s249, 8
        %s251 = scalar_lea.vmem %s1, %s250
        %s252 = smul.u32 2, %s24
        %p253 = scmp.lt.s32.totalorder %s22, 1
        %s254 = scalar_select %p253, %s22, 1
        %p255 = scmp.lt.s32.totalorder %s252, 1
        %s256 = scalar_select %p255, %s252, 1
        %s257 = smul.addr %s254, 2
        %s258 = sadd.s32 %s256, %s257
        %s259 = smul.addr %s258, 8
        %s260 = scalar_lea.vmem %s2, %s259
        %s261 = smul.u32 2, %s24
        %s262 = smul.u32 %s24, 16
        %p263 = scmp.eq.s32.totalorder %s24, 0
        // Predicated region
        $region33: #{tpu_custom_call.1} parent=31 // pred_check
          %p264 = pneg %p263
        $region34: #{tpu_custom_call.1} parent=31 // pred_check_branch
          %266 = sbr.rel (%p264) target = $region36
        $region35: #{tpu_custom_call.1} parent=31 // pred_region
          %267 = vst [vmem:[#allocation2] sm:$0xff] -1e+30
        $region36: #{tpu_custom_call.1} parent=31 // pred_fallthru
          _
        %v268 = vld [vmem:[%s244] sm:$0xff]
        %v269 = vld [vmem:[%s251] sm:$0xff]
        %v270 = vld [vmem:[#allocation2] sm:$0xff]
        loop: start=0, step=1, limit=16
        $region37: #{tpu_custom_call.1} parent=31 // loop_pre_header
          _
        $region38: #{tpu_custom_call.1} parent=31 // loop_header
          %s272 = sphi 0, %s276
          %p273 = scmp.ge.s32.totalorder %s272, 16
          %v277 = vphi %v270, %v292
        $region39: #{tpu_custom_call.1} parent=31 // loop_header_branch
          %275 = sbr.rel (%p273) target = $region43
        $region40: #{tpu_custom_call.1} parent=31 // loop_body
          %s278 = sadd.s32 %s262, %s272
          %s279 = scalar_lea.vmem %s260, %s272
          %v280 = vld [vmem:[%s279] sm:$0x1]
          %v281 = vstv %s278
          %vm282 = vcmp.le.s32.totalorder %v268, %v281
          %vm283 = vcmp.ge.s32.totalorder %v269, %v281
          %vm284 = vmand %vm282, %vm283
          %v285 = vperm.slane %v280, 0
          %v286 = vmax.f32 %v277, %v285
          %v287 = vsel %vm284, 1, 0
          %288 = vset.pattern.permute.xlu0 0
          %289 = vperm.xlu0 %288, %v287
          %v290 = vpop.permute.xlu0 %289
          %vm291 = vcmp.eq.s32.totalorder %v290, 1
          %v292 = vsel %vm291, %v286, %v277
        $region41: #{tpu_custom_call.1} parent=31 // loop_footer
          %s276 = sadd.s32 1, %s272
        $region42: #{tpu_custom_call.1} parent=31 // loop_footer_branch
          %271 = sbr.rel target = $region38
        $region43: #{tpu_custom_call.1} parent=31 // loop_exit
          _
        %293 = vst [vmem:[#allocation2] sm:$0xff] %v277
        // Predicated region
        $region44: #{tpu_custom_call.1} parent=31 // pred_check
          %p294 = pneg %p263
        $region45: #{tpu_custom_call.1} parent=31 // pred_check_branch
          %296 = sbr.rel (%p294) target = $region47
        $region46: #{tpu_custom_call.1} parent=31 // pred_region
          %v297 = vld [vmem:[#allocation2] sm:$0xff]
          %298 = vst [vmem:[%s237] sm:$0xff] %v297
        $region47: #{tpu_custom_call.1} parent=31 // pred_fallthru
          _
        %s299 = sand.u32 %s130, 1
        %s300 = scalar_lea.sflag [#allocation4], %s299
        %s301 = sand.u32 %s130, 1
        %s302 = smul.addr %s301, 8
        %s303 = scalar_lea.vmem [#allocation3], %s302
        // Predicated region
        $region48: #{tpu_custom_call.1} parent=31 // pred_check
          %p304 = pneg %p140
        $region49: #{tpu_custom_call.1} parent=31 // pred_check_branch
          %306 = sbr.rel (%p304) target = $region51
        $region50: #{tpu_custom_call.1} parent=31 // pred_region
          %308 = vsyncadd %s300, 0
          %s309 = sadd.s32 %s23, %s22
          %s310 = smul.addr %s309, 8
          %s311 = scalar_lea.hbm %s3, %s310
          %s313 = sshll.u32 %s303, 4
          %s314 = int_to_ptr.vmem [resolvable:$true] %s313
          %s315 = sshll.u32 %s311, 4
          %s316 = int_to_ptr.hbm [resolvable:$true] %s315
          %318 = dma.vmem_to_hbm [thread:$0]  %s314, 128, %s316, %s300
        $region51: #{tpu_custom_call.1} parent=31 // pred_fallthru
          _
      $region32: #{tpu_custom_call.1} parent=5 // pred_fallthru
        _
      %p319 = scmp.le.s32.totalorder 2, %s12
      // Predicated region
      $region52: #{tpu_custom_call.1} parent=5 // pred_check
        %p320 = pneg %p319
      $region53: #{tpu_custom_call.1} parent=5 // pred_check_branch
        %322 = sbr.rel (%p320) target = $region55
      $region54: #{tpu_custom_call.1} parent=5 // pred_region
        %s323 = ssub.s32 %s12, 2
        // Predicated region
        $region56: #{tpu_custom_call.1} parent=54 // pred_check
          %p324 = pneg %p146
        $region57: #{tpu_custom_call.1} parent=54 // pred_check_branch
          %326 = sbr.rel (%p324) target = $region59
        $region58: #{tpu_custom_call.1} parent=54 // pred_region
          %s327 = sand.u32 %s131, 1
          %s328 = scalar_lea.sflag [#allocation4], %s327
          %s329 = sand.u32 %s131, 1
          %s330 = smul.addr %s329, 8
          %s331 = scalar_lea.vmem [#allocation3], %s330
          %333 = dma.done %s328, 128
        $region59: #{tpu_custom_call.1} parent=54 // pred_fallthru
          _
      $region55: #{tpu_custom_call.1} parent=5 // pred_fallthru
        _
    $region6: #{tpu_custom_call.1} parent=1 // loop_footer
      %s16 = sadd.s32 1, %s12
    $region7: #{tpu_custom_call.1} parent=1 // loop_footer_branch
      %11 = sbr.rel target = $region3
    $region8: #{tpu_custom_call.1} parent=1 // loop_exit
      _
    %334 = vsyncpa [#allocation4], 1
    %s335 = scalar_lea.sflag [#allocation4], 1
    %336 = vsyncpa %s335, 1

</llo_original>
